<compile_context>
chip_gen: v6e
topology: v6e:2x2x1
jax: 0.10.0
libtpu: 0.0.40
codegen_flags: <defaults>
</compile_context>

<pallas_src>
import functools

import jax
import jax.numpy as jnp
import numpy as np
from jax import lax
from jax.experimental import pallas as pl
from jax.experimental.pallas import tpu as pltpu


# ---------------------------------------------------------------------------
# Kernels
# ---------------------------------------------------------------------------

def _head_matmul_kernel(x_ref, w_ref, b_ref, o_ref):
    """Single-K-step (weight-resident) head matmul.

    x_ref : (rows, nf)      activation tile
    w_ref : (1, nf, tw)     weight, already (K, N) oriented (canonical MXU form)
    b_ref : (1, 1, tw)      bias
    o_ref : (1, rows, tw)   output tile
    """
    acc = lax.dot_general(
        x_ref[...], w_ref[0],
        dimension_numbers=(((1,), (0,)), ((), ())),
        preferred_element_type=jnp.float32,
    )
    o_ref[0] = (acc + b_ref[0]).astype(o_ref.dtype)


def _head_matmul_ktiled_kernel(x_ref, w_ref, b_ref, o_ref, acc_ref):
    """K-tiled fallback with an f32 VMEM accumulator (K = grid axis 1)."""
    k = pl.program_id(1)

    @pl.when(k == 0)
    def _init():
        acc_ref[...] = jnp.zeros_like(acc_ref)

    acc_ref[...] += lax.dot_general(
        x_ref[...], w_ref[0],
        dimension_numbers=(((1,), (0,)), ((), ())),
        preferred_element_type=jnp.float32,
    )

    @pl.when(k == pl.num_programs(1) - 1)
    def _finalize():
        o_ref[0] = (acc_ref[...] + b_ref[0]).astype(o_ref.dtype)


# ---------------------------------------------------------------------------
# Tile / VMEM selection helpers (all trace-time Python on static shapes)
# ---------------------------------------------------------------------------

def _round_up(x, m):
    return -(-x // m) * m


def _divisor_tiles(dim, quantum, cap):
    """Multiples of `quantum` that divide `dim`, descending, capped at `cap`.
    Falls back to the full extent (always a legal block) if none exist."""
    cap = min(dim, cap)
    cands = [t for t in range(quantum, cap + 1, quantum) if dim % t == 0]
    if not cands:
        cands = [dim]
    return sorted(cands, reverse=True)


def _vmem_budget_and_limit():
    """Generation-aware VMEM budgeting (v5e/v6e: 128 MiB physical, v7x: 64 MiB)."""
    try:
        cap = int(pltpu.get_tpu_info().vmem_capacity_bytes)
    except Exception:
        cap = 64 * 1024 * 1024                      # conservative (v7x-sized) fallback
    vmem_limit = min((cap * 3) // 4, 100 * 1024 * 1024)
    budget = min(int(cap * 0.55), 72 * 1024 * 1024, vmem_limit - (4 << 20))
    return budget, vmem_limit


def _select_shared_tiles(M, nf, tw, xi, wi, oi, budget):
    """Pick (bm, bk) for the shared head.  bk == nf => weight-resident, no acc."""
    def usage(bm, bk, k_tiled):
        u = (2 * bm * bk * xi          # x tile (double-buffered)
             + 2 * bk * tw * wi        # weight tile (double-buffered, conservative)
             + 2 * tw * wi             # bias
             + 2 * bm * tw * oi)       # output tile (double-buffered)
        if k_tiled:
            u += bm * tw * 4           # f32 accumulator scratch
        return u

    m_tiles = _divisor_tiles(M, 8, 1024)

    # Preferred: full K (W fetched from HBM exactly once, no per-K acc RMW).
    for bm in m_tiles:
        if usage(bm, nf, False) <= budget:
            # Megacore: keep >= 2 steps on the parallel axis when M allows it.
            if M // bm < 2 and M >= 16:
                for bm2 in m_tiles:
                    if bm2 <= max(8, M // 2) and usage(bm2, nf, False) <= budget:
                        return bm2, nf
            return bm, nf

    # Fallback: K tiling (weight re-streamed once per M tile) -> favor large bm.
    k_tiles = _divisor_tiles(nf, 128, 4096)
    for bm in m_tiles:
        for bk in k_tiles:
            if bk < nf and usage(bm, bk, True) <= budget:
                return bm, bk
    return m_tiles[-1], k_tiles[-1]    # degenerate last resort: smallest legal tiles


def _select_k_tile(rows, nf, tw, xi, wi, oi, budget):
    """Pick bk for the per-variable (individual) path; rows = bs is fixed."""
    def usage(bk, k_tiled):
        u = (2 * rows * bk * xi + 2 * bk * tw * wi + 2 * tw * wi
             + 2 * rows * tw * oi)
        if k_tiled:
            u += rows * tw * 4
        return u

    if usage(nf, False) <= budget:
        return nf
    k_tiles = _divisor_tiles(nf, 128, 4096)
    for bk in k_tiles:
        if bk < nf and usage(bk, True) <= budget:
            return bk
    return k_tiles[-1]


# ---------------------------------------------------------------------------
# Forward
# ---------------------------------------------------------------------------

def flatten_head_forward(x, weight, bias, *, individual: bool,
                         compute_dtype=None,
                         vmem_budget_override: int | None = None):
    """PatchTST Flatten_Head forward.

    x      : (bs, n_vars, d_model, patch_num)
    weight : (n_heads, target_window, nf)   (PyTorch nn.Linear layout), nf = d_model*patch_num
    bias   : (n_heads, target_window)
    n_heads == n_vars if individual else 1.
    compute_dtype: optional (e.g. jnp.bfloat16) low-precision input cast;
                   accumulation stays f32, output keeps x's original dtype.
    Returns (bs, n_vars, target_window).
    """
    bs, n_vars, d_model, patch_num = x.shape
    nf = d_model * patch_num
    n_heads, tw, nf_w = weight.shape
    assert nf_w == nf, (nf_w, nf)
    assert n_heads == (n_vars if individual else 1)
    out_dtype = x.dtype

    if compute_dtype is not None:
        x = x.astype(compute_dtype)
        weight = weight.astype(compute_dtype)

    # Canonical MXU orientation: (K, N) weight so the kernel contracts x's last
    # dim against the weight's first dim (no per-step weight relayout).  With
    # static model parameters this transpose is a one-time transform.
    w_t = jnp.swapaxes(weight, 1, 2)               # (n_heads, nf, tw)
    bias3 = bias.reshape(n_heads, 1, tw)

    xi = jnp.dtype(x.dtype).itemsize
    wi = jnp.dtype(w_t.dtype).itemsize
    oi = jnp.dtype(out_dtype).itemsize
    budget, vmem_limit = _vmem_budget_and_limit()
    if vmem_budget_override is not None:           # testing / tuning hook
        budget = int(vmem_budget_override)

    if individual:
        # Per-variable heads.  The per-variable flatten is a free view of the
        # contiguous (bs, n_vars, d_model, patch_num) layout.  If nf is not a
        # multiple of 128 the per-variable lane offsets (v * nf) would be
        # unaligned, so pad K with zero weight rows (contributes exactly 0).
        nf_p = nf
        if n_vars > 1 and nf % 128 != 0:
            nf_p = _round_up(nf, 128)
            x3 = jnp.pad(x.reshape(bs, n_vars, nf),
                         ((0, 0), (0, 0), (0, nf_p - nf)))
            x2 = x3.reshape(bs, n_vars * nf_p)
            w_t = jnp.pad(w_t, ((0, 0), (0, nf_p - nf), (0, 0)))
        else:
            x2 = x.reshape(bs, n_vars * nf)

        bk = _select_k_tile(bs, nf_p, tw, xi, wi, oi, budget)
        k_blocks = nf_p // bk
        o_shape = (n_vars, bs, tw)                  # head-major; small transpose after
        if k_blocks == 1:
            kernel = _head_matmul_kernel
            grid = (n_vars,)
            semantics = ("parallel",)
            x_spec = pl.BlockSpec((bs, nf_p), lambda v: (0, v))
            w_spec = pl.BlockSpec((1, nf_p, tw), lambda v: (v, 0, 0))
            b_spec = pl.BlockSpec((1, 1, tw), lambda v: (v, 0, 0))
            o_spec = pl.BlockSpec((1, bs, tw), lambda v: (v, 0, 0))
            scratch = []
        else:
            kernel = _head_matmul_ktiled_kernel
            grid = (n_vars, k_blocks)
            semantics = ("parallel", "arbitrary")
            x_spec = pl.BlockSpec((bs, bk), lambda v, k: (0, v * k_blocks + k))
            w_spec = pl.BlockSpec((1, bk, tw), lambda v, k: (v, k, 0))
            b_spec = pl.BlockSpec((1, 1, tw), lambda v, k: (v, 0, 0))
            o_spec = pl.BlockSpec((1, bs, tw), lambda v, k: (v, 0, 0))
            scratch = [pltpu.VMEM((bs, tw), jnp.float32)]
        w_reads = 1                                  # each head's weight read once
    else:
        # Shared head: collapse (bs, n_vars) into one M dimension (free view)
        # and do one large matmul.  Preferred config keeps the weight resident
        # (constant weight block index across M tiles -> fetched once).
        M = bs * n_vars
        x2 = x.reshape(M, nf)
        bm, bk = _select_shared_tiles(M, nf, tw, xi, wi, oi, budget)
        k_blocks = nf // bk
        m_blocks = M // bm
        o_shape = (1, M, tw)
        if k_blocks == 1:
            kernel = _head_matmul_kernel
            grid = (m_blocks,)
            semantics = ("parallel",)
            x_spec = pl.BlockSpec((bm, nf), lambda m: (m, 0))
            w_spec = pl.BlockSpec((1, nf, tw), lambda m: (0, 0, 0))   # constant -> resident
            b_spec = pl.BlockSpec((1, 1, tw), lambda m: (0, 0, 0))
            o_spec = pl.BlockSpec((1, bm, tw), lambda m: (0, m, 0))
            scratch = []
            w_reads = 1
        else:
            kernel = _head_matmul_ktiled_kernel
            grid = (m_blocks, k_blocks)
            semantics = ("parallel", "arbitrary")
            x_spec = pl.BlockSpec((bm, bk), lambda m, k: (m, k))
            w_spec = pl.BlockSpec((1, bk, tw), lambda m, k: (0, k, 0))
            b_spec = pl.BlockSpec((1, 1, tw), lambda m, k: (0, 0, 0))
            o_spec = pl.BlockSpec((1, bm, tw), lambda m, k: (0, m, 0))
            scratch = [pltpu.VMEM((bm, tw), jnp.float32)]
            w_reads = m_blocks                       # weight re-streamed per M tile

    cost = pl.CostEstimate(
        flops=2 * bs * n_vars * nf * tw,             # real tw, no padding
        transcendentals=0,
        bytes_accessed=int(x2.size * xi
                           + w_reads * w_t.size * wi
                           + bias3.size * jnp.dtype(bias3.dtype).itemsize
                           + int(np.prod(o_shape)) * oi),
    )

    out = pl.pallas_call(
        kernel,
        out_shape=jax.ShapeDtypeStruct(o_shape, out_dtype),
        grid_spec=pltpu.PrefetchScalarGridSpec(
            num_scalar_prefetch=0,
            grid=grid,
            in_specs=[x_spec, w_spec, b_spec],
            out_specs=o_spec,
            scratch_shapes=scratch,
        ),
        compiler_params=pltpu.CompilerParams(
            dimension_semantics=semantics,
            vmem_limit_bytes=vmem_limit,
        ),
        cost_estimate=cost,
    )(x2, w_t, bias3)

    if individual:
        # TODO(synk): a consumer that accepts head-major (n_vars, bs, tw) output
        # could skip this (small) transpose entirely.
        out = jnp.transpose(out, (1, 0, 2))          # -> (bs, n_vars, tw)
    else:
        out = out.reshape(bs, n_vars, tw)            # free view
    return out


# ---------------------------------------------------------------------------
# Reference + self-test
# ---------------------------------------------------------------------------

def _reference(x, weight, bias, individual):
    bs, n_vars, d_model, patch_num = x.shape
    nf = d_model * patch_num
    z = x.reshape(bs, n_vars, nf)
    if individual:
        outs = [z[:, i, :] @ weight[i].T + bias[i] for i in range(n_vars)]
        return jnp.stack(outs, axis=1)
    return z @ weight[0].T + bias[0]


def _rand_linear(key_w, key_b, n_heads, tw, nf):
    bound = 1.0 / np.sqrt(nf)                        # mimics nn.Linear init range
    w = jax.random.uniform(key_w, (n_heads, tw, nf), minval=-bound, maxval=bound,
                           dtype=jnp.float32)
    b = jax.random.uniform(key_b, (n_heads, tw), minval=-bound, maxval=bound,
                           dtype=jnp.float32)
    return w, b


if __name__ == "__main__":
    key = jax.random.PRNGKey(0)
    kx, kw, kb, kw2, kb2, kx3, kw3, kb3, kw4, kb4 = jax.random.split(key, 10)

    # --- Shape set 1 (weight-resident / single-K-step paths) -----------------
    bs, n_vars, d_model, patch_num = 2, 4, 16, 8
    nf = d_model * patch_num                         # 128
    target_window = 24
    x = jax.random.normal(kx, (bs, n_vars, d_model, patch_num), dtype=jnp.float32)

    # individual=False: shared Linear head
    w_shared, b_shared = _rand_linear(kw, kb, 1, target_window, nf)
    fwd_shared = jax.jit(functools.partial(flatten_head_forward, individual=False))
    y_shared = jax.block_until_ready(fwd_shared(x, w_shared, b_shared))
    np.testing.assert_allclose(np.asarray(y_shared),
                               np.asarray(_reference(x, w_shared, b_shared, False)),
                               rtol=1e-5, atol=1e-5)

    # individual=True: one Linear per variable
    w_ind, b_ind = _rand_linear(kw2, kb2, n_vars, target_window, nf)
    fwd_ind = jax.jit(functools.partial(flatten_head_forward, individual=True))
    y_ind = jax.block_until_ready(fwd_ind(x, w_ind, b_ind))
    np.testing.assert_allclose(np.asarray(y_ind),
                               np.asarray(_reference(x, w_ind, b_ind, True)),
                               rtol=1e-5, atol=1e-5)

    # bf16 compute path (halved HBM traffic; f32 accumulation) — looser tolerance
    fwd_bf16 = jax.jit(functools.partial(flatten_head_forward, individual=False,
                                         compute_dtype=jnp.bfloat16))
    y_bf16 = jax.block_until_ready(fwd_bf16(x, w_shared, b_shared))
    np.testing.assert_allclose(np.asarray(y_bf16),
                               np.asarray(_reference(x, w_shared, b_shared, False)),
                               rtol=3e-2, atol=3e-2)

    # --- Shape set 2: force the K-tiled fallback via a tiny VMEM budget ------
    d_model2, patch_num2 = 16, 16
    nf2 = d_model2 * patch_num2                      # 256 -> bk=128, k_blocks=2
    x2 = jax.random.normal(kx3, (bs, n_vars, d_model2, patch_num2), dtype=jnp.float32)

    w_sh2, b_sh2 = _rand_linear(kw3, kb3, 1, target_window, nf2)
    fwd_sh_kt = jax.jit(functools.partial(flatten_head_forward, individual=False,
                                          vmem_budget_override=40_000))
    y_sh_kt = jax.block_until_ready(fwd_sh_kt(x2, w_sh2, b_sh2))
    np.testing.assert_allclose(np.asarray(y_sh_kt),
                               np.asarray(_reference(x2, w_sh2, b_sh2, False)),
                               rtol=1e-5, atol=1e-5)

    w_in2, b_in2 = _rand_linear(kw4, kb4, n_vars, target_window, nf2)
    fwd_in_kt = jax.jit(functools.partial(flatten_head_forward, individual=True,
                                          vmem_budget_override=40_000))
    y_in_kt = jax.block_until_ready(fwd_in_kt(x2, w_in2, b_in2))
    np.testing.assert_allclose(np.asarray(y_in_kt),
                               np.asarray(_reference(x2, w_in2, b_in2, True)),
                               rtol=1e-5, atol=1e-5)

    # TODO(synk): nn.Dropout(head_dropout) is identity at inference (p=0 here); not modeled.
    print("KERNEL_OK")
</pallas_src>

<mosaic_0001>
module attributes {stable_mosaic.version = 11 : i64} {
  func.func @_head_matmul_kernel(%arg0: i32, %arg1: memref<8x128xf32, #tpu.memory_space<vmem>>, %arg2: memref<1x128x24xf32, #tpu.memory_space<vmem>>, %arg3: memref<1x1x24xf32, #tpu.memory_space<vmem>>, %arg4: memref<1x8x24xf32, #tpu.memory_space<vmem>>) attributes {dimension_semantics = [#tpu.dimension_semantics<parallel>], iteration_bounds = array<i64: 1>, scalar_prefetch = 0 : i64, scratch_operands = 0 : i64, tpu.core_type = #tpu.core_type<tc>, window_params = [{transform_indices = @transform_0, window_bounds = array<i64: 8, 128>}, {pipeline_mode = #tpu.pipeline_mode<synchronous>, transform_indices = @transform_1, window_bounds = array<i64: 1, 128, 24>}, {pipeline_mode = #tpu.pipeline_mode<synchronous>, transform_indices = @transform_2, window_bounds = array<i64: 1, 1, 24>}, {transform_indices = @transform_3, window_bounds = array<i64: 1, 8, 24>}]} {
    %c0 = arith.constant 0 : index
    %c0_0 = arith.constant 0 : index
    %0 = vector.load %arg1[%c0, %c0_0] : memref<8x128xf32, #tpu.memory_space<vmem>>, vector<8x128xf32>
    %c0_1 = arith.constant 0 : index
    %c0_2 = arith.constant 0 : index
    %c0_3 = arith.constant 0 : index
    %1 = vector.load %arg2[%c0_1, %c0_2, %c0_3] : memref<1x128x24xf32, #tpu.memory_space<vmem>>, vector<1x128x24xf32>
    %2 = vector.shape_cast %1 : vector<1x128x24xf32> to vector<128x24xf32>
    %cst = arith.constant dense<0.000000e+00> : vector<8x24xf32>
    %3 = tpu.matmul %0, %2, %cst {dimension_numbers = #tpu.dot_dimension_numbers<[1], [0], [0], [1], [0, 0, 1, 1], [], []>} : vector<8x128xf32>, vector<128x24xf32>, vector<8x24xf32> -> vector<8x24xf32>
    %c0_4 = arith.constant 0 : index
    %c0_5 = arith.constant 0 : index
    %c0_6 = arith.constant 0 : index
    %4 = vector.load %arg3[%c0_4, %c0_5, %c0_6] : memref<1x1x24xf32, #tpu.memory_space<vmem>>, vector<1x1x24xf32>
    %5 = vector.shape_cast %4 : vector<1x1x24xf32> to vector<1x24xf32>
    %6 = vector.broadcast %5 : vector<1x24xf32> to vector<8x24xf32>
    %7 = arith.addf %3, %6 : vector<8x24xf32>
    %c0_7 = arith.constant 0 : index
    %c0_8 = arith.constant 0 : index
    %c0_9 = arith.constant 0 : index
    %8 = vector.load %arg4[%c0_7, %c0_8, %c0_9] : memref<1x8x24xf32, #tpu.memory_space<vmem>>, vector<1x8x24xf32>
    %9 = vector.shape_cast %8 : vector<1x8x24xf32> to vector<8x24xf32>
    %10 = vector.shape_cast %7 : vector<8x24xf32> to vector<1x8x24xf32>
    tpu.vector_store %arg4[%c0_7, %c0_8, %c0_9], %10 {strides = array<i32>} : memref<1x8x24xf32, #tpu.memory_space<vmem>>, vector<1x8x24xf32>,
    return
  }
  func.func @transform_0(%arg0: i32) -> (i32, i32) {
    %c0_i32 = arith.constant 0 : i32
    %c0_i32_0 = arith.constant 0 : i32
    return %arg0, %c0_i32 : i32, i32
  }
  func.func @transform_1(%arg0: i32) -> (i32, i32, i32) {
    %c0_i32 = arith.constant 0 : i32
    %c0_i32_0 = arith.constant 0 : i32
    %c0_i32_1 = arith.constant 0 : i32
    %c0_i32_2 = arith.constant 0 : i32
    return %c0_i32, %c0_i32_0, %c0_i32_1 : i32, i32, i32
  }
  func.func @transform_2(%arg0: i32) -> (i32, i32, i32) {
    %c0_i32 = arith.constant 0 : i32
    %c0_i32_0 = arith.constant 0 : i32
    %c0_i32_1 = arith.constant 0 : i32
    %c0_i32_2 = arith.constant 0 : i32
    return %c0_i32, %c0_i32_0, %c0_i32_1 : i32, i32, i32
  }
  func.func @transform_3(%arg0: i32) -> (i32, i32, i32) {
    %c0_i32 = arith.constant 0 : i32
    %c0_i32_0 = arith.constant 0 : i32
    %c0_i32_1 = arith.constant 0 : i32
    return %c0_i32, %arg0, %c0_i32_0 : i32, i32, i32
  }
}

</mosaic_0001>

<llo_original>
// kernel: flatten_head_forward.1
$region0: #{flatten_head_forward.1}
  #allocation0 [shape = 'u32[]', space=smem, size = 0x4, offset = 0x4, fixed_abs, tag = 'smem constant byte address 0x4 - core index']
  #allocation1 [shape = 'u32[144,128]{1,0:T(1,128)}', space=vmem, size = 0x12000, scoped, tag = 'internal scratch']
  %s0 = inlined_call_operand.vmem [shape: f32[8,128], index: 0, kind: input, shape index: {}]
  %s1 = inlined_call_operand.vmem [shape: f32[1,128,24], index: 1, kind: input, shape index: {}]
  %s2 = inlined_call_operand.vmem [shape: f32[1,1,24], index: 2, kind: input, shape index: {}]
  %s3 = inlined_call_operand.hbm [shape: f32[1,8,24], index: 3, kind: output, shape index: {}]
  %s4 = sld [smem:[#allocation0]]
  $region22: #{flatten_head_forward.1} parent=0
    _
  %s6 = ssub.s32 1, %s4
  %s7 = scalar_select 0, %s6, %s4
  $region1: #{flatten_head_forward.1} parent=0
    #allocation2 [shape = 'u8[4096]{0}', space=vmem, size = 0x1000, scoped, tag = 'output window, operand 0, single buffered']
    #allocation3 [shape = 's32[1]{0}', space=sflag, size = 0x4, scoped, tag = 'scoped memory for flatten_head_forward.1']
    %8 = vsyncpa [#allocation3], 0
    // Predicated region
    $region2: #{flatten_head_forward.1} parent=1 // pred_check
      _
    $region3: #{flatten_head_forward.1} parent=1 // pred_check_branch
      %10 = sbr.rel (0) target = $region5
    $region4: #{flatten_head_forward.1} parent=1 // pred_region
      _
    $region5: #{flatten_head_forward.1} parent=1 // pred_fallthru
      _
    // Predicated region
    $region6: #{flatten_head_forward.1} parent=1 // pred_check
      _
    $region7: #{flatten_head_forward.1} parent=1 // pred_check_branch
      %12 = sbr.rel (0) target = $region9
    $region8: #{flatten_head_forward.1} parent=1 // pred_region
      _
    $region9: #{flatten_head_forward.1} parent=1 // pred_fallthru
      _
    // Predicated region
    $region10: #{flatten_head_forward.1} parent=1 // pred_check
      _
    $region11: #{flatten_head_forward.1} parent=1 // pred_check_branch
      %14 = sbr.rel (0) target = $region13
    $region12: #{flatten_head_forward.1} parent=1 // pred_region
      _
    $region13: #{flatten_head_forward.1} parent=1 // pred_fallthru
      _
    %v15 = vld [vmem:[%s0] sm:$0xff]
    %v16 = vld [vmem:[%s1] sm:$0xff]
    %v17 = vld [vmem:[%s1 + $0x8] sm:$0xff]
    %v18 = vld [vmem:[%s1 + $0x10] sm:$0xff]
    %v19 = vld [vmem:[%s1 + $0x18] sm:$0xff]
    %v20 = vld [vmem:[%s1 + $0x20] sm:$0xff]
    %v21 = vld [vmem:[%s1 + $0x28] sm:$0xff]
    %v22 = vld [vmem:[%s1 + $0x30] sm:$0xff]
    %v23 = vld [vmem:[%s1 + $0x38] sm:$0xff]
    %v24 = vld [vmem:[%s1 + $0x40] sm:$0xff]
    %v25 = vld [vmem:[%s1 + $0x48] sm:$0xff]
    %v26 = vld [vmem:[%s1 + $0x50] sm:$0xff]
    %v27 = vld [vmem:[%s1 + $0x58] sm:$0xff]
    %v28 = vld [vmem:[%s1 + $0x60] sm:$0xff]
    %v29 = vld [vmem:[%s1 + $0x68] sm:$0xff]
    %v30 = vld [vmem:[%s1 + $0x70] sm:$0xff]
    %v31 = vld [vmem:[%s1 + $0x78] sm:$0xff]
    %v32 = vld [vmem:[%s2] sm:$0x1]
    %v34 = vlaneseq
    %v35 = vshrl.u32 %v34, 7
    %v36 = vsub.s32 0, %v35
    %v37 = vrot.slane %v32, %v36
    %39 = vmatprep.subr.mxu0 0.0
    %40 = vmatpush1.msra.mxu0 %v31
    %41 = vmatprep.subr.mxu0 0.0
    %42 = vmatpush1.msra.mxu0 %v30
    %43 = vmatprep.subr.mxu0 0.0
    %44 = vmatpush1.msra.mxu0 %v29
    %45 = vmatprep.subr.mxu0 0.0
    %46 = vmatpush1.msra.mxu0 %v28
    %47 = vmatprep.subr.mxu0 0.0
    %48 = vmatpush1.msra.mxu0 %v27
    %49 = vmatprep.subr.mxu0 0.0
    %50 = vmatpush1.msra.mxu0 %v26
    %51 = vmatprep.subr.mxu0 0.0
    %52 = vmatpush1.msra.mxu0 %v25
    %53 = vmatprep.subr.mxu0 0.0
    %54 = vmatpush1.msra.mxu0 %v24
    %55 = vmatprep.subr.mxu0 0.0
    %56 = vmatpush1.msra.mxu0 %v23
    %57 = vmatprep.subr.mxu0 0.0
    %58 = vmatpush1.msra.mxu0 %v22
    %59 = vmatprep.subr.mxu0 0.0
    %60 = vmatpush1.msra.mxu0 %v21
    %61 = vmatprep.subr.mxu0 0.0
    %62 = vmatpush1.msra.mxu0 %v20
    %63 = vmatprep.subr.mxu0 0.0
    %64 = vmatpush1.msra.mxu0 %v19
    %65 = vmatprep.subr.mxu0 0.0
    %66 = vmatpush1.msra.mxu0 %v18
    %67 = vmatprep.subr.mxu0 0.0
    %68 = vmatpush1.msra.mxu0 %v17
    %69 = vmatprep.subr.mxu0 0.0
    %70 = vmatpush1.msra.mxu0 %v16
    %71 = vmatprep.subr.mxu0 0.0
    %72 = vmatpush2.msra.mxu0 0.0
    %73 = vmatprep.subr.mxu0 0.0
    %74 = vmatpush2.msra.mxu0 0.0
    %75 = vmatprep.subr.mxu0 0.0
    %76 = vmatpush2.msra.mxu0 0.0
    %77 = vmatprep.subr.mxu0 0.0
    %78 = vmatpush2.msra.mxu0 0.0
    %79 = vmatprep.subr.mxu0 0.0
    %80 = vmatpush2.msra.mxu0 0.0
    %81 = vmatprep.subr.mxu0 0.0
    %82 = vmatpush2.msra.mxu0 0.0
    %83 = vmatprep.subr.mxu0 0.0
    %84 = vmatpush2.msra.mxu0 0.0
    %85 = vmatprep.subr.mxu0 0.0
    %86 = vmatpush2.msra.mxu0 0.0
    %87 = vmatprep.subr.mxu0 0.0
    %88 = vmatpush2.msra.mxu0 0.0
    %89 = vmatprep.subr.mxu0 0.0
    %90 = vmatpush2.msra.mxu0 0.0
    %91 = vmatprep.subr.mxu0 0.0
    %92 = vmatpush2.msra.mxu0 0.0
    %93 = vmatprep.subr.mxu0 0.0
    %94 = vmatpush2.msra.mxu0 0.0
    %95 = vmatprep.subr.mxu0 0.0
    %96 = vmatpush2.msra.mxu0 0.0
    %97 = vmatprep.subr.mxu0 0.0
    %98 = vmatpush2.msra.mxu0 0.0
    %99 = vmatprep.subr.mxu0 0.0
    %100 = vmatpush2.msra.mxu0 0.0
    %101 = vmatprep.subr.mxu0 0.0
    %102 = vmatpush2.msra.mxu0 0.0
    %103 = vmatprep.mubr.f32.mxu0 0.0
    %104 = vmatmul.mubr.f32.gmra.mxu0 %v15
    %v105 = vpop.f32.mrf.mxu0
    %v106 = vadd.f32 %v37, %v105
    %v107 = vpop.f32.mrf.mxu0
    %108 = vdwg.mxu0
    %vm109 = vcmask 195584
    %110 = vst.msk [vmem:[#allocation2] sm:$0xff] %vm109, %v106
    // Predicated region
    $region14: #{flatten_head_forward.1} parent=1 // pred_check
      _
    $region15: #{flatten_head_forward.1} parent=1 // pred_check_branch
      %112 = sbr.rel (0) target = $region17
    $region16: #{flatten_head_forward.1} parent=1 // pred_region
      %s114 = ssub.s32 128, 128
      %115 = vsyncadd [#allocation3], %s114
      %s117 = sshll.u32 [#allocation2], 4
      %s118 = int_to_ptr.vmem [resolvable:$true] %s117
      %120 = dma.vmem_to_hbm [thread:$0]  %s118, 128, %s3, [#allocation3]
    $region17: #{flatten_head_forward.1} parent=1 // pred_fallthru
      _
    // Predicated region
    $region18: #{flatten_head_forward.1} parent=1 // pred_check
      _
    $region19: #{flatten_head_forward.1} parent=1 // pred_check_branch
      %122 = sbr.rel (0) target = $region21
    $region20: #{flatten_head_forward.1} parent=1 // pred_region
      %123 = dma.done [#allocation3], 128
    $region21: #{flatten_head_forward.1} parent=1 // pred_fallthru
      _
    %124 = vsyncpa [#allocation3], 1

</llo_original>
